<compile_context>
chip_gen: v7x
topology: tpu7x:2x2x1
jax: 0.10.0
libtpu: 0.0.40
codegen_flags: <defaults>
</compile_context>

<pallas_src>
import jax
import jax.numpy as jnp
from jax.experimental import pallas as pl
from jax.experimental.pallas import tpu as pltpu

IN_FEATURES = 4    # CartPole-v0 observation_space.shape == (4,)
HIDDEN = 64
N_ACTIONS = 2      # CartPole-v0 action_space.n == 2
LANE = 128         # lane-dense padded width for layer 2 / q output


def _round_up(n, m):
    return ((n + m - 1) // m) * m


def _mlp_kernel(x_ref, w1_ref, b1_ref, w2_ref, b2_ref, q_ref, a_ref):
    # ---- layer 1: (TB, 4) @ (4, 64), f32 accumulate ----
    h = jnp.dot(x_ref[...], w1_ref[...],
                preferred_element_type=jnp.float32)                  # (TB, 64)
    h = jnp.tanh(h + b1_ref[...])                                    # VPU add + EUP tanh

    # ---- layer 2: lane-dense (TB, 64) @ (64, 128); pad cols carry -1e30 ----
    q = jnp.dot(h, w2_ref[...], preferred_element_type=jnp.float32)  # (TB, 128)
    q = q + b2_ref[...]
    q_ref[...] = q.astype(q_ref.dtype)                               # full-lane store

    # ---- fused greedy action (Network.act): first index of the max q ----
    col = jax.lax.broadcasted_iota(jnp.int32, q.shape, 1)
    qmax = jnp.max(q, axis=-1, keepdims=True)
    a_ref[...] = jnp.min(jnp.where(q == qmax, col, LANE),
                         axis=-1, keepdims=True).astype(a_ref.dtype)


def network_forward(x, w1, b1, w2, b2, *, block_b=1024):
    """Returns (q_values (B, 2) f32, greedy_actions (B,) int32)."""
    batch = x.shape[0]
    x = x.astype(jnp.float32)

    # Batch tile: multiple of 8 sublanes; pad batch up to a whole number of tiles.
    tb = min(block_b, _round_up(batch, 8))
    padded_b = _round_up(batch, tb)
    if padded_b != batch:
        x = jnp.pad(x, ((0, padded_b - batch), (0, 0)))

    # Lane-dense second layer: zero weights and -1e30 bias on the pad columns
    # so the fused argmax can never select a padded action.
    w2p = jnp.zeros((HIDDEN, LANE), jnp.float32).at[:, :N_ACTIONS].set(w2)
    b2p = jnp.full((1, LANE), -1e30, jnp.float32).at[:, :N_ACTIONS].set(b2)

    grid = (padded_b // tb,)
    flops = 2 * padded_b * (IN_FEATURES * HIDDEN + HIDDEN * LANE)
    bytes_accessed = 4 * (padded_b * IN_FEATURES            # x
                          + IN_FEATURES * HIDDEN + HIDDEN   # w1, b1
                          + HIDDEN * LANE + LANE            # w2p, b2p
                          + padded_b * LANE                 # q out
                          + padded_b)                       # actions out

    q_pad, actions = pl.pallas_call(
        _mlp_kernel,
        out_shape=(jax.ShapeDtypeStruct((padded_b, LANE), jnp.float32),
                   jax.ShapeDtypeStruct((padded_b, 1), jnp.int32)),
        grid=grid,
        in_specs=[
            pl.BlockSpec((tb, IN_FEATURES), lambda i: (i, 0)),       # x: batch-tiled
            pl.BlockSpec((IN_FEATURES, HIDDEN), lambda i: (0, 0)),   # w1: resident
            pl.BlockSpec((1, HIDDEN), lambda i: (0, 0)),             # b1: resident
            pl.BlockSpec((HIDDEN, LANE), lambda i: (0, 0)),          # w2 (padded): resident
            pl.BlockSpec((1, LANE), lambda i: (0, 0)),               # b2 (padded): resident
        ],
        out_specs=(
            pl.BlockSpec((tb, LANE), lambda i: (i, 0)),              # q: lane-dense
            pl.BlockSpec((tb, 1), lambda i: (i, 0)),                 # greedy action
        ),
        compiler_params=pltpu.CompilerParams(
            dimension_semantics=("parallel",)),                      # megacore on v7x
        cost_estimate=pl.CostEstimate(
            flops=flops,
            transcendentals=padded_b * HIDDEN,
            bytes_accessed=bytes_accessed),
    )(x, w1, b1, w2p, b2p)

    return q_pad[:batch, :N_ACTIONS], actions[:batch, 0]


def init_params(key):
    """Deterministic init mirroring PyTorch Linear default U(-1/sqrt(fan_in), +)."""
    k1, k2, k3, k4 = jax.random.split(key, 4)
    bound1 = 1.0 / jnp.sqrt(jnp.float32(IN_FEATURES))
    bound2 = 1.0 / jnp.sqrt(jnp.float32(HIDDEN))
    w1 = jax.random.uniform(k1, (IN_FEATURES, HIDDEN), jnp.float32, -bound1, bound1)
    b1 = jax.random.uniform(k2, (1, HIDDEN), jnp.float32, -bound1, bound1)
    w2 = jax.random.uniform(k3, (HIDDEN, N_ACTIONS), jnp.float32, -bound2, bound2)
    b2 = jax.random.uniform(k4, (1, N_ACTIONS), jnp.float32, -bound2, bound2)
    return w1, b1, w2, b2


if __name__ == "__main__":
    key = jax.random.PRNGKey(0)
    pkey, xkey1, xkey2 = jax.random.split(key, 3)
    w1, b1, w2, b2 = init_params(pkey)

    # act()-style tiny batch (padded to one 8-row tile inside the wrapper).
    x_small = jax.random.normal(xkey1, (2, IN_FEATURES), jnp.float32)
    q_small, a_small = network_forward(x_small, w1, b1, w2, b2)
    q_small, a_small = jax.block_until_ready((q_small, a_small))

    # Replay-style batch exercising multiple pipelined grid steps
    # (block_b=128 -> grid of 3 with a padded final tile).
    x_big = jax.random.normal(xkey2, (300, IN_FEATURES), jnp.float32)
    q_big, a_big = network_forward(x_big, w1, b1, w2, b2, block_b=128)
    q_big, a_big = jax.block_until_ready((q_big, a_big))

    def reference(x):
        h = jnp.tanh(jnp.dot(x, w1, preferred_element_type=jnp.float32) + b1)
        return jnp.dot(h, w2, preferred_element_type=jnp.float32) + b2

    for x, q, a in ((x_small, q_small, a_small), (x_big, q_big, a_big)):
        q_ref = reference(x)
        assert q.shape == (x.shape[0], N_ACTIONS)
        assert a.shape == (x.shape[0],)
        assert jnp.allclose(q, q_ref, atol=1e-4, rtol=1e-4)
        # Fused greedy action must agree with argmax over the kernel's own q.
        assert jnp.array_equal(a, jnp.argmax(q, axis=1).astype(jnp.int32))

    # TODO(synk): gym env stepping / replay buffer / training loop are host-side
    # control flow and are intentionally not part of the kernel.
    print("KERNEL_OK")
</pallas_src>

<mosaic_0001>
module attributes {stable_mosaic.version = 11 : i64} {
  func.func @_mlp_kernel(%arg0: i32, %arg1: memref<8x4xf32, #tpu.memory_space<vmem>>, %arg2: memref<4x64xf32, #tpu.memory_space<vmem>>, %arg3: memref<1x64xf32, #tpu.memory_space<vmem>>, %arg4: memref<64x128xf32, #tpu.memory_space<vmem>>, %arg5: memref<1x128xf32, #tpu.memory_space<vmem>>, %arg6: memref<8x128xf32, #tpu.memory_space<vmem>>, %arg7: memref<8x1xi32, #tpu.memory_space<vmem>>) attributes {dimension_semantics = [#tpu.dimension_semantics<parallel>], iteration_bounds = array<i64: 1>, scalar_prefetch = 0 : i64, scratch_operands = 0 : i64, tpu.core_type = #tpu.core_type<tc>, window_params = [{transform_indices = @transform_0, window_bounds = array<i64: 8, 4>}, {pipeline_mode = #tpu.pipeline_mode<synchronous>, transform_indices = @transform_1, window_bounds = array<i64: 4, 64>}, {pipeline_mode = #tpu.pipeline_mode<synchronous>, transform_indices = @transform_2, window_bounds = array<i64: 1, 64>}, {pipeline_mode = #tpu.pipeline_mode<synchronous>, transform_indices = @transform_3, window_bounds = array<i64: 64, 128>}, {pipeline_mode = #tpu.pipeline_mode<synchronous>, transform_indices = @transform_4, window_bounds = array<i64: 1, 128>}, {transform_indices = @transform_5, window_bounds = array<i64: 8, 128>}, {transform_indices = @transform_6, window_bounds = array<i64: 8, 1>}]} {
    %c0 = arith.constant 0 : index
    %c0_0 = arith.constant 0 : index
    %0 = vector.load %arg1[%c0, %c0_0] : memref<8x4xf32, #tpu.memory_space<vmem>>, vector<8x4xf32>
    %c0_1 = arith.constant 0 : index
    %c0_2 = arith.constant 0 : index
    %1 = vector.load %arg2[%c0_1, %c0_2] : memref<4x64xf32, #tpu.memory_space<vmem>>, vector<4x64xf32>
    %cst = arith.constant dense<0.000000e+00> : vector<8x64xf32>
    %2 = tpu.matmul %0, %1, %cst {dimension_numbers = #tpu.dot_dimension_numbers<[1], [0], [0], [1], [0, 0, 1, 1], [], []>} : vector<8x4xf32>, vector<4x64xf32>, vector<8x64xf32> -> vector<8x64xf32>
    %c0_3 = arith.constant 0 : index
    %c0_4 = arith.constant 0 : index
    %3 = vector.load %arg3[%c0_3, %c0_4] : memref<1x64xf32, #tpu.memory_space<vmem>>, vector<1x64xf32>
    %4 = vector.broadcast %3 : vector<1x64xf32> to vector<8x64xf32>
    %5 = arith.addf %2, %4 : vector<8x64xf32>
    %6 = math.tanh %5 : vector<8x64xf32>
    %c0_5 = arith.constant 0 : index
    %c0_6 = arith.constant 0 : index
    %7 = vector.load %arg4[%c0_5, %c0_6] : memref<64x128xf32, #tpu.memory_space<vmem>>, vector<64x128xf32>
    %cst_7 = arith.constant dense<0.000000e+00> : vector<8x128xf32>
    %8 = tpu.matmul %6, %7, %cst_7 {dimension_numbers = #tpu.dot_dimension_numbers<[1], [0], [0], [1], [0, 0, 1, 1], [], []>} : vector<8x64xf32>, vector<64x128xf32>, vector<8x128xf32> -> vector<8x128xf32>
    %c0_8 = arith.constant 0 : index
    %c0_9 = arith.constant 0 : index
    %9 = vector.load %arg5[%c0_8, %c0_9] : memref<1x128xf32, #tpu.memory_space<vmem>>, vector<1x128xf32>
    %10 = vector.broadcast %9 : vector<1x128xf32> to vector<8x128xf32>
    %11 = arith.addf %8, %10 : vector<8x128xf32>
    %c0_10 = arith.constant 0 : index
    %c0_11 = arith.constant 0 : index
    %12 = vector.load %arg6[%c0_10, %c0_11] : memref<8x128xf32, #tpu.memory_space<vmem>>, vector<8x128xf32>
    tpu.vector_store %arg6[%c0_10, %c0_11], %11 {strides = array<i32>} : memref<8x128xf32, #tpu.memory_space<vmem>>, vector<8x128xf32>,
    %13 = tpu.iota {dimensions = array<i32: 1>} : vector<8x128xi32>
    %cst_12 = arith.constant dense<0xFF800000> : vector<8xf32>
    %14 = vector.multi_reduction <maximumf>, %11, %cst_12 [1] : vector<8x128xf32> to vector<8xf32>
    %15 = vector.shape_cast %14 : vector<8xf32> to vector<8x1xf32>
    %16 = vector.broadcast %15 : vector<8x1xf32> to vector<8x128xf32>
    %17 = arith.cmpf oeq, %11, %16 : vector<8x128xf32>
    %c128_i32 = arith.constant 128 : i32
    %18 = vector.broadcast %c128_i32 : i32 to vector<8x128xi32>
    %19 = arith.select %17, %13, %18 : vector<8x128xi1>, vector<8x128xi32>
    %cst_13 = arith.constant dense<2147483647> : vector<8xi32>
    %20 = vector.multi_reduction <minsi>, %19, %cst_13 [1] : vector<8x128xi32> to vector<8xi32>
    %21 = vector.shape_cast %20 : vector<8xi32> to vector<8x1xi32>
    %c0_14 = arith.constant 0 : index
    %c0_15 = arith.constant 0 : index
    %22 = vector.load %arg7[%c0_14, %c0_15] : memref<8x1xi32, #tpu.memory_space<vmem>>, vector<8x1xi32>
    tpu.vector_store %arg7[%c0_14, %c0_15], %21 {strides = array<i32>} : memref<8x1xi32, #tpu.memory_space<vmem>>, vector<8x1xi32>,
    return
  }
  func.func @transform_0(%arg0: i32) -> (i32, i32) {
    %c0_i32 = arith.constant 0 : i32
    %c0_i32_0 = arith.constant 0 : i32
    return %arg0, %c0_i32 : i32, i32
  }
  func.func @transform_1(%arg0: i32) -> (i32, i32) {
    %c0_i32 = arith.constant 0 : i32
    %c0_i32_0 = arith.constant 0 : i32
    %c0_i32_1 = arith.constant 0 : i32
    return %c0_i32, %c0_i32_0 : i32, i32
  }
  func.func @transform_2(%arg0: i32) -> (i32, i32) {
    %c0_i32 = arith.constant 0 : i32
    %c0_i32_0 = arith.constant 0 : i32
    %c0_i32_1 = arith.constant 0 : i32
    return %c0_i32, %c0_i32_0 : i32, i32
  }
  func.func @transform_3(%arg0: i32) -> (i32, i32) {
    %c0_i32 = arith.constant 0 : i32
    %c0_i32_0 = arith.constant 0 : i32
    %c0_i32_1 = arith.constant 0 : i32
    return %c0_i32, %c0_i32_0 : i32, i32
  }
  func.func @transform_4(%arg0: i32) -> (i32, i32) {
    %c0_i32 = arith.constant 0 : i32
    %c0_i32_0 = arith.constant 0 : i32
    %c0_i32_1 = arith.constant 0 : i32
    return %c0_i32, %c0_i32_0 : i32, i32
  }
  func.func @transform_5(%arg0: i32) -> (i32, i32) {
    %c0_i32 = arith.constant 0 : i32
    %c0_i32_0 = arith.constant 0 : i32
    return %arg0, %c0_i32 : i32, i32
  }
  func.func @transform_6(%arg0: i32) -> (i32, i32) {
    %c0_i32 = arith.constant 0 : i32
    %c0_i32_0 = arith.constant 0 : i32
    return %arg0, %c0_i32 : i32, i32
  }
}

</mosaic_0001>

<llo_original>
// kernel: tpu_custom_call.1
$region0: #{tpu_custom_call.1}
  #allocation0 [shape = 'u32[]', space=smem, size = 0x4, offset = 0x4, fixed_abs, tag = 'smem constant byte address 0x4 - core index']
  #allocation1 [shape = 'u32[144,128]{1,0:T(1,128)}', space=vmem, size = 0x12000, scoped, tag = 'internal scratch']
  %s0 = inlined_call_operand.vmem [shape: f32[8,4], index: 0, kind: input, shape index: {}]
  %s1 = inlined_call_operand.vmem [shape: f32[4,64], index: 1, kind: input, shape index: {}]
  %s2 = inlined_call_operand.vmem [shape: f32[1,64], index: 2, kind: input, shape index: {}]
  %s3 = inlined_call_operand.hbm [shape: f32[64,128], index: 3, kind: input, shape index: {}]
  %s4 = inlined_call_operand.vmem [shape: f32[1,128], index: 4, kind: input, shape index: {}]
  %s5 = inlined_call_operand.hbm [shape: f32[8,128], index: 5, kind: output, shape index: {0}]
  %s6 = inlined_call_operand.vmem [shape: s32[8,1], index: 6, kind: output, shape index: {1}]
  %7 = xla_tuple %s5, %s6
  %s8 = sld [smem:[#allocation0]]
  $region42: #{tpu_custom_call.1} parent=0
    _
  %s10 = ssub.s32 1, %s8
  %s11 = scalar_select 0, %s10, %s8
  $region1: #{tpu_custom_call.1} parent=0
    #allocation2 [shape = 'u8[32768]{0}', space=vmem, size = 0x8000, scoped, tag = 'input window, operand 3, single buffered']
    #allocation3 [shape = 's32[1]{0}', space=sflag, size = 0x4, scoped, tag = 'scoped memory for tpu_custom_call.1']
    #allocation4 [shape = 's32[1]{0}', space=sflag, size = 0x4, scoped, tag = 'scoped memory for tpu_custom_call.1']
    #allocation5 [shape = 'u8[4096]{0}', space=vmem, size = 0x1000, scoped, tag = 'output window, operand 0, single buffered']
    %12 = vsyncpa [#allocation3], 0
    %13 = vsyncpa [#allocation4], 0
    // Predicated region
    $region2: #{tpu_custom_call.1} parent=1 // pred_check
      _
    $region3: #{tpu_custom_call.1} parent=1 // pred_check_branch
      %15 = sbr.rel (0) target = $region5
    $region4: #{tpu_custom_call.1} parent=1 // pred_region
      _
    $region5: #{tpu_custom_call.1} parent=1 // pred_fallthru
      _
    // Predicated region
    $region6: #{tpu_custom_call.1} parent=1 // pred_check
      _
    $region7: #{tpu_custom_call.1} parent=1 // pred_check_branch
      %17 = sbr.rel (0) target = $region9
    $region8: #{tpu_custom_call.1} parent=1 // pred_region
      _
    $region9: #{tpu_custom_call.1} parent=1 // pred_fallthru
      _
    // Predicated region
    $region10: #{tpu_custom_call.1} parent=1 // pred_check
      _
    $region11: #{tpu_custom_call.1} parent=1 // pred_check_branch
      %19 = sbr.rel (0) target = $region13
    $region12: #{tpu_custom_call.1} parent=1 // pred_region
      _
    $region13: #{tpu_custom_call.1} parent=1 // pred_fallthru
      _
    // Predicated region
    $region14: #{tpu_custom_call.1} parent=1 // pred_check
      _
    $region15: #{tpu_custom_call.1} parent=1 // pred_check_branch
      %21 = sbr.rel (0) target = $region17
    $region16: #{tpu_custom_call.1} parent=1 // pred_region
      %s23 = ssub.s32 1024, 1024
      %24 = vsyncadd [#allocation3], %s23
      %s25 = sshll.u32 [#allocation2], 4
      %s26 = int_to_ptr.vmem [resolvable:$true] %s25
      %31 = dma.hbm_to_vmem [thread:$0]  %s3, 1024, %s26, [#allocation3], 128, 128, 8
    $region17: #{tpu_custom_call.1} parent=1 // pred_fallthru
      _
    // Predicated region
    $region18: #{tpu_custom_call.1} parent=1 // pred_check
      _
    $region19: #{tpu_custom_call.1} parent=1 // pred_check_branch
      %33 = sbr.rel (0) target = $region21
    $region20: #{tpu_custom_call.1} parent=1 // pred_region
      _
    $region21: #{tpu_custom_call.1} parent=1 // pred_fallthru
      _
    // Predicated region
    $region22: #{tpu_custom_call.1} parent=1 // pred_check
      _
    $region23: #{tpu_custom_call.1} parent=1 // pred_check_branch
      %35 = sbr.rel (0) target = $region25
    $region24: #{tpu_custom_call.1} parent=1 // pred_region
      %36 = dma.done [#allocation3], 1024
    $region25: #{tpu_custom_call.1} parent=1 // pred_fallthru
      _
    %v37 = vld [vmem:[%s0] sm:$0xff]
    %v38 = vld [vmem:[%s1] sm:$0xf]
    %v39 = vld [vmem:[%s2] sm:$0x1]
    %v41 = vlaneseq
    %v42 = vshrl.u32 %v41, 7
    %v43 = vsub.s32 0, %v42
    %v44 = vrot.slane %v39, %v43
    %vm46 = vcmask 31744
    %v48 = vsel %vm46, %v37, 0
    %vm50 = vcmask 1043456
    %v52 = vsel %vm50, %v38, 0
    %54 = vmatprep.subr.mxu0 0.0
    %55 = vmatpush1.msra.mxu0 %v52
    %56 = vmatprep.subr.mxu0 0.0
    %57 = vmatpush1.msra.mxu0 0.0
    %58 = vmatprep.subr.mxu0 0.0
    %59 = vmatpush1.msra.mxu0 0.0
    %60 = vmatprep.subr.mxu0 0.0
    %61 = vmatpush1.msra.mxu0 0.0
    %62 = vmatprep.subr.mxu0 0.0
    %63 = vmatpush1.msra.mxu0 0.0
    %64 = vmatprep.subr.mxu0 0.0
    %65 = vmatpush1.msra.mxu0 0.0
    %66 = vmatprep.subr.mxu0 0.0
    %67 = vmatpush1.msra.mxu0 0.0
    %68 = vmatprep.subr.mxu0 0.0
    %69 = vmatpush1.msra.mxu0 0.0
    %70 = vmatprep.subr.mxu0 0.0
    %71 = vmatpush1.msra.mxu0 0.0
    %72 = vmatprep.subr.mxu0 0.0
    %73 = vmatpush1.msra.mxu0 0.0
    %74 = vmatprep.subr.mxu0 0.0
    %75 = vmatpush1.msra.mxu0 0.0
    %76 = vmatprep.subr.mxu0 0.0
    %77 = vmatpush1.msra.mxu0 0.0
    %78 = vmatprep.subr.mxu0 0.0
    %79 = vmatpush1.msra.mxu0 0.0
    %80 = vmatprep.subr.mxu0 0.0
    %81 = vmatpush1.msra.mxu0 0.0
    %82 = vmatprep.subr.mxu0 0.0
    %83 = vmatpush1.msra.mxu0 0.0
    %84 = vmatprep.subr.mxu0 0.0
    %85 = vmatpush1.msra.mxu0 0.0
    %86 = vmatprep.subr.mxu0 0.0
    %87 = vmatpush1.msra.mxu0 0.0
    %88 = vmatprep.subr.mxu0 0.0
    %89 = vmatpush1.msra.mxu0 0.0
    %90 = vmatprep.subr.mxu0 0.0
    %91 = vmatpush1.msra.mxu0 0.0
    %92 = vmatprep.subr.mxu0 0.0
    %93 = vmatpush1.msra.mxu0 0.0
    %94 = vmatprep.subr.mxu0 0.0
    %95 = vmatpush1.msra.mxu0 0.0
    %96 = vmatprep.subr.mxu0 0.0
    %97 = vmatpush1.msra.mxu0 0.0
    %98 = vmatprep.subr.mxu0 0.0
    %99 = vmatpush1.msra.mxu0 0.0
    %100 = vmatprep.subr.mxu0 0.0
    %101 = vmatpush1.msra.mxu0 0.0
    %102 = vmatprep.subr.mxu0 0.0
    %103 = vmatpush1.msra.mxu0 0.0
    %104 = vmatprep.subr.mxu0 0.0
    %105 = vmatpush1.msra.mxu0 0.0
    %106 = vmatprep.subr.mxu0 0.0
    %107 = vmatpush1.msra.mxu0 0.0
    %108 = vmatprep.subr.mxu0 0.0
    %109 = vmatpush1.msra.mxu0 0.0
    %110 = vmatprep.subr.mxu0 0.0
    %111 = vmatpush1.msra.mxu0 0.0
    %112 = vmatprep.subr.mxu0 0.0
    %113 = vmatpush1.msra.mxu0 0.0
    %114 = vmatprep.subr.mxu0 0.0
    %115 = vmatpush1.msra.mxu0 0.0
    %116 = vmatprep.subr.mxu0 0.0
    %117 = vmatpush1.msra.mxu0 0.0
    %118 = vmatprep.mubr.f32.mxu0 0.0
    %119 = vmatmul.mubr.f32.gmra.mrb[0].mxu0 %v48
    %v120 = vpop.f32.mrb[0].mxu0
    %v121 = vadd.f32 %v44, %v120
    %v122 = vpop.f32.mrb[0].mxu0
    %123 = vdwg.mxu0
    %v124 = vtanh.pop %v121
    %v125 = vld [vmem:[#allocation2] sm:$0xff]
    %v126 = vld [vmem:[#allocation2 + $0x8] sm:$0xff]
    %v127 = vld [vmem:[#allocation2 + $0x10] sm:$0xff]
    %v128 = vld [vmem:[#allocation2 + $0x18] sm:$0xff]
    %v129 = vld [vmem:[#allocation2 + $0x20] sm:$0xff]
    %v130 = vld [vmem:[#allocation2 + $0x28] sm:$0xff]
    %v131 = vld [vmem:[#allocation2 + $0x30] sm:$0xff]
    %v132 = vld [vmem:[#allocation2 + $0x38] sm:$0xff]
    %v133 = vld [vmem:[%s4] sm:$0x1]
    %v135 = vlaneseq
    %v136 = vshrl.u32 %v135, 7
    %v137 = vsub.s32 0, %v136
    %v138 = vrot.slane %v133, %v137
    %vm140 = vcmask 523264
    %v142 = vsel %vm140, %v124, 0
    %144 = vmatprep.subr.mxu0 0.0
    %145 = vmatpush1.msra.mxu0 %v125
    %146 = vmatprep.subr.mxu0 0.0
    %147 = vmatpush1.msra.mxu0 %v126
    %148 = vmatprep.subr.mxu0 0.0
    %149 = vmatpush1.msra.mxu0 %v127
    %150 = vmatprep.subr.mxu0 0.0
    %151 = vmatpush1.msra.mxu0 %v128
    %152 = vmatprep.subr.mxu0 0.0
    %153 = vmatpush1.msra.mxu0 %v129
    %154 = vmatprep.subr.mxu0 0.0
    %155 = vmatpush1.msra.mxu0 %v130
    %156 = vmatprep.subr.mxu0 0.0
    %157 = vmatpush1.msra.mxu0 %v131
    %158 = vmatprep.subr.mxu0 0.0
    %159 = vmatpush1.msra.mxu0 %v132
    %160 = vmatprep.subr.mxu0 0.0
    %161 = vmatpush1.msra.mxu0 0.0
    %162 = vmatprep.subr.mxu0 0.0
    %163 = vmatpush1.msra.mxu0 0.0
    %164 = vmatprep.subr.mxu0 0.0
    %165 = vmatpush1.msra.mxu0 0.0
    %166 = vmatprep.subr.mxu0 0.0
    %167 = vmatpush1.msra.mxu0 0.0
    %168 = vmatprep.subr.mxu0 0.0
    %169 = vmatpush1.msra.mxu0 0.0
    %170 = vmatprep.subr.mxu0 0.0
    %171 = vmatpush1.msra.mxu0 0.0
    %172 = vmatprep.subr.mxu0 0.0
    %173 = vmatpush1.msra.mxu0 0.0
    %174 = vmatprep.subr.mxu0 0.0
    %175 = vmatpush1.msra.mxu0 0.0
    %176 = vmatprep.subr.mxu0 0.0
    %177 = vmatpush1.msra.mxu0 0.0
    %178 = vmatprep.subr.mxu0 0.0
    %179 = vmatpush1.msra.mxu0 0.0
    %180 = vmatprep.subr.mxu0 0.0
    %181 = vmatpush1.msra.mxu0 0.0
    %182 = vmatprep.subr.mxu0 0.0
    %183 = vmatpush1.msra.mxu0 0.0
    %184 = vmatprep.subr.mxu0 0.0
    %185 = vmatpush1.msra.mxu0 0.0
    %186 = vmatprep.subr.mxu0 0.0
    %187 = vmatpush1.msra.mxu0 0.0
    %188 = vmatprep.subr.mxu0 0.0
    %189 = vmatpush1.msra.mxu0 0.0
    %190 = vmatprep.subr.mxu0 0.0
    %191 = vmatpush1.msra.mxu0 0.0
    %192 = vmatprep.subr.mxu0 0.0
    %193 = vmatpush1.msra.mxu0 0.0
    %194 = vmatprep.subr.mxu0 0.0
    %195 = vmatpush1.msra.mxu0 0.0
    %196 = vmatprep.subr.mxu0 0.0
    %197 = vmatpush1.msra.mxu0 0.0
    %198 = vmatprep.subr.mxu0 0.0
    %199 = vmatpush1.msra.mxu0 0.0
    %200 = vmatprep.subr.mxu0 0.0
    %201 = vmatpush1.msra.mxu0 0.0
    %202 = vmatprep.subr.mxu0 0.0
    %203 = vmatpush1.msra.mxu0 0.0
    %204 = vmatprep.subr.mxu0 0.0
    %205 = vmatpush1.msra.mxu0 0.0
    %206 = vmatprep.subr.mxu0 0.0
    %207 = vmatpush1.msra.mxu0 0.0
    %208 = vmatprep.mubr.f32.mxu0 0.0
    %209 = vmatmul.mubr.f32.gmra.mrb[0].mxu0 %v142
    %v210 = vpop.f32.mrb[0].mxu0
    %v211 = vadd.f32 %v138, %v210
    %v212 = vpop.f32.mrb[0].mxu0
    %213 = vdwg.mxu0
    %214 = vst [vmem:[#allocation5] sm:$0xff] %v211
    %v215 = vlaneseq
    %v216 = vand.u32 %v215, 127
    %217 = vmax.xlane.f32.xlu0 %v211
    %v218 = vpop.xlane.xlu0 %217
    %vm219 = vcmp.eq.f32.partialorder %v211, %v218
    %v220 = vsel %vm219, %v216, 128
    %v221 = vand.u32 %v220, 65535
    %v222 = vshra.s32 %v220, 16
    %v223 = vcvt.s32.f32 %v221
    %v224 = vcvt.s32.f32 %v222
    %225 = vmin.xlane.f32.xlu0 %v224
    %v226 = vpop.xlane.xlu0 %225
    %vm227 = vcmp.eq.f32.partialorder %v224, %v226
    %v228 = vsel %vm227, %v223, inf
    %229 = vmin.xlane.f32.xlu0 %v228
    %v230 = vpop.xlane.xlu0 %229
    %v231 = vcvt.f32.s32 %v230
    %v232 = vcvt.f32.s32 %v226
    %v233 = vshll.u32 %v232, 16
    %v234 = vadd.s32 %v233, %v231
    %vm235 = vcmask 7168
    %236 = vst.msk [vmem:[%s6] sm:$0xff] %vm235, %v234
    // Predicated region
    $region26: #{tpu_custom_call.1} parent=1 // pred_check
      _
    $region27: #{tpu_custom_call.1} parent=1 // pred_check_branch
      %238 = sbr.rel (0) target = $region29
    $region28: #{tpu_custom_call.1} parent=1 // pred_region
      %s240 = ssub.s32 128, 128
      %241 = vsyncadd [#allocation4], %s240
      %s243 = sshll.u32 [#allocation5], 4
      %s244 = int_to_ptr.vmem [resolvable:$true] %s243
      %246 = dma.vmem_to_hbm [thread:$0]  %s244, 128, %s5, [#allocation4]
    $region29: #{tpu_custom_call.1} parent=1 // pred_fallthru
      _
    // Predicated region
    $region30: #{tpu_custom_call.1} parent=1 // pred_check
      _
    $region31: #{tpu_custom_call.1} parent=1 // pred_check_branch
      %248 = sbr.rel (0) target = $region33
    $region32: #{tpu_custom_call.1} parent=1 // pred_region
      _
    $region33: #{tpu_custom_call.1} parent=1 // pred_fallthru
      _
    // Predicated region
    $region34: #{tpu_custom_call.1} parent=1 // pred_check
      _
    $region35: #{tpu_custom_call.1} parent=1 // pred_check_branch
      %250 = sbr.rel (0) target = $region37
    $region36: #{tpu_custom_call.1} parent=1 // pred_region
      %251 = dma.done [#allocation4], 128
    $region37: #{tpu_custom_call.1} parent=1 // pred_fallthru
      _
    // Predicated region
    $region38: #{tpu_custom_call.1} parent=1 // pred_check
      _
    $region39: #{tpu_custom_call.1} parent=1 // pred_check_branch
      %253 = sbr.rel (0) target = $region41
    $region40: #{tpu_custom_call.1} parent=1 // pred_region
      _
    $region41: #{tpu_custom_call.1} parent=1 // pred_fallthru
      _
    %254 = vsyncpa [#allocation3], 1
    %255 = vsyncpa [#allocation4], 1

</llo_original>
